<compile_context>
chip_gen: v7x
topology: tpu7x:2x2x1
jax: 0.10.0
libtpu: 0.0.40
codegen_flags: <defaults>
</compile_context>

<pallas_src>
import jax
import jax.numpy as jnp
from jax.experimental import pallas as pl
from jax.experimental.pallas import tpu as pltpu


_LANE = 128     # lane width (last dim of a vreg)
_SUBLANE = 8    # f32 sublane count (second-to-last dim of a vreg)


def _round_up(x, m):
    return (x + m - 1) // m * m


def _pick_tm(B):
    """Batch-tile rows: multiple of 8, capped at 512, and aiming for >= 2 grid steps."""
    b8 = _round_up(B, _SUBLANE)
    if b8 <= _SUBLANE:
        return _SUBLANE                       # single tiny tile; nothing to split
    half = _round_up(pl.cdiv(b8, 2), _SUBLANE)
    return max(_SUBLANE, min(512, half))


def _classifier_kernel(x_ref, w_ref, b_ref, o_ref):
    # x_ref : (tm, F)       flattened-activation batch tile
    # w_ref : (F, N_pad)    pre-transposed classifier weight (MXU-native K x N, lane-dense)
    # b_ref : (1, N_pad)    classifier bias (zero-padded)
    # o_ref : (tm, N_pad)   logits tile (lane-dense, unmasked stores)
    acc = jnp.dot(x_ref[...], w_ref[...], preferred_element_type=jnp.float32)
    o_ref[...] = (acc + b_ref[...]).astype(o_ref.dtype)


def prepare_classifier_params(weight, bias):
    """One-time parameter prep (hoisted out of the forward path).

    weight : (num_classes, 1024)  -- PyTorch nn.Linear layout (out, in)
    bias   : (num_classes,)
    returns (w_prepped (F, N_pad), b_prepped (1, N_pad))
    """
    N, F = weight.shape
    N_pad = _round_up(N, _LANE)
    w_p = jnp.pad(weight, ((0, N_pad - N), (0, 0))).T          # (F, N_pad), lane-dense
    b_p = jnp.pad(bias, (0, N_pad - N)).reshape(1, N_pad)
    return w_p, b_p


def cnn_forward(x_nchw, w_prepped, b_prepped, num_classes):
    """Pallas equivalent of CNN.forward for the defined part of the graph.

    x_nchw     : (B, C, H, W) with C*H*W == 1024
    w_prepped  : (1024, N_pad)  from prepare_classifier_params
    b_prepped  : (1, N_pad)
    returns logits of shape (B, num_classes)
    """
    B = x_nchw.shape[0]
    x_flat = jnp.reshape(x_nchw, (B, -1))        # == out.view(B, -1); no copy of substance
    F = x_flat.shape[1]
    N_pad = w_prepped.shape[1]

    tm = _pick_tm(B)
    grid = (pl.cdiv(B, tm),)                     # ragged last block handled by Pallas masking

    cost = pl.CostEstimate(
        flops=2 * B * F * N_pad,
        transcendentals=0,
        bytes_accessed=(B * F + F * N_pad + N_pad + B * N_pad) * 4,
    )

    out_p = pl.pallas_call(
        _classifier_kernel,
        out_shape=jax.ShapeDtypeStruct((B, N_pad), x_flat.dtype),
        grid_spec=pltpu.PrefetchScalarGridSpec(
            num_scalar_prefetch=0,
            grid=grid,
            in_specs=[
                pl.BlockSpec((tm, F), lambda i: (i, 0)),        # batch tile
                pl.BlockSpec((F, N_pad), lambda i: (0, 0)),     # whole padded weight, resident
                pl.BlockSpec((1, N_pad), lambda i: (0, 0)),     # bias, resident
            ],
            out_specs=pl.BlockSpec((tm, N_pad), lambda i: (i, 0)),
        ),
        compiler_params=pltpu.CompilerParams(
            dimension_semantics=("parallel",)),   # batch tiles split across TCs (v7x)
        cost_estimate=cost,
    )(x_flat, w_prepped, b_prepped)

    return out_p[:, :num_classes]


def reference_forward(x_nchw, weight, bias):
    B = x_nchw.shape[0]
    x_flat = jnp.reshape(x_nchw, (B, -1))
    return x_flat @ weight.T + bias


if __name__ == "__main__":
    num_classes = 3
    C, H, W = 4, 16, 16                 # C*H*W = 1024, matching nn.Linear(1024, 3)
    in_features = C * H * W

    key = jax.random.PRNGKey(0)
    kx, kw, kb, kx2 = jax.random.split(key, 4)

    # Deterministic stand-in for nn.Linear's default init (kaiming-uniform-ish bound).
    bound = 1.0 / (in_features ** 0.5)
    weight = jax.random.uniform(kw, (num_classes, in_features),
                                minval=-bound, maxval=bound, dtype=jnp.float32)
    bias = jax.random.uniform(kb, (num_classes,),
                              minval=-bound, maxval=bound, dtype=jnp.float32)

    # One-time parameter prep (pad classes to 128 lanes, transpose to (F, N_pad)).
    w_prep, b_prep = prepare_classifier_params(weight, bias)

    # Case 1: spec-sized input (batch=2) — single (partial) tile.
    x = jax.random.normal(kx, (2, C, H, W), dtype=jnp.float32)
    out = jax.block_until_ready(cnn_forward(x, w_prep, b_prep, num_classes))
    ref = reference_forward(x, weight, bias)
    assert out.shape == (2, num_classes), out.shape
    assert jnp.allclose(out, ref, atol=1e-4, rtol=1e-4), (out, ref)

    # Case 2: larger ragged batch — exercises multi-tile grid + boundary-block masking.
    x2 = jax.random.normal(kx2, (20, C, H, W), dtype=jnp.float32)
    out2 = jax.block_until_ready(cnn_forward(x2, w_prep, b_prep, num_classes))
    ref2 = reference_forward(x2, weight, bias)
    assert out2.shape == (20, num_classes), out2.shape
    assert jnp.allclose(out2, ref2, atol=1e-4, rtol=1e-4), (out2, ref2)

    print("KERNEL_OK")
</pallas_src>

<mosaic_0001>
module attributes {stable_mosaic.version = 11 : i64} {
  func.func @_classifier_kernel(%arg0: i32, %arg1: memref<8x1024xf32, #tpu.memory_space<vmem>>, %arg2: memref<1024x128xf32, #tpu.memory_space<vmem>>, %arg3: memref<1x128xf32, #tpu.memory_space<vmem>>, %arg4: memref<8x128xf32, #tpu.memory_space<vmem>>) attributes {dimension_semantics = [#tpu.dimension_semantics<parallel>], iteration_bounds = array<i64: 1>, scalar_prefetch = 0 : i64, scratch_operands = 0 : i64, tpu.core_type = #tpu.core_type<tc>, window_params = [{transform_indices = @transform_0, window_bounds = array<i64: 8, 1024>}, {pipeline_mode = #tpu.pipeline_mode<synchronous>, transform_indices = @transform_1, window_bounds = array<i64: 1024, 128>}, {pipeline_mode = #tpu.pipeline_mode<synchronous>, transform_indices = @transform_2, window_bounds = array<i64: 1, 128>}, {transform_indices = @transform_3, window_bounds = array<i64: 8, 128>}]} {
    %c0 = arith.constant 0 : index
    %c0_0 = arith.constant 0 : index
    %0 = vector.load %arg1[%c0, %c0_0] : memref<8x1024xf32, #tpu.memory_space<vmem>>, vector<8x1024xf32>
    %c0_1 = arith.constant 0 : index
    %c0_2 = arith.constant 0 : index
    %1 = vector.load %arg2[%c0_1, %c0_2] : memref<1024x128xf32, #tpu.memory_space<vmem>>, vector<1024x128xf32>
    %cst = arith.constant dense<0.000000e+00> : vector<8x128xf32>
    %2 = tpu.matmul %0, %1, %cst {dimension_numbers = #tpu.dot_dimension_numbers<[1], [0], [0], [1], [0, 0, 1, 1], [], []>} : vector<8x1024xf32>, vector<1024x128xf32>, vector<8x128xf32> -> vector<8x128xf32>
    %c0_3 = arith.constant 0 : index
    %c0_4 = arith.constant 0 : index
    %3 = vector.load %arg3[%c0_3, %c0_4] : memref<1x128xf32, #tpu.memory_space<vmem>>, vector<1x128xf32>
    %4 = vector.broadcast %3 : vector<1x128xf32> to vector<8x128xf32>
    %5 = arith.addf %2, %4 : vector<8x128xf32>
    %c0_5 = arith.constant 0 : index
    %c0_6 = arith.constant 0 : index
    %6 = vector.load %arg4[%c0_5, %c0_6] : memref<8x128xf32, #tpu.memory_space<vmem>>, vector<8x128xf32>
    tpu.vector_store %arg4[%c0_5, %c0_6], %5 {strides = array<i32>} : memref<8x128xf32, #tpu.memory_space<vmem>>, vector<8x128xf32>,
    return
  }
  func.func @transform_0(%arg0: i32) -> (i32, i32) {
    %c0_i32 = arith.constant 0 : i32
    %c0_i32_0 = arith.constant 0 : i32
    return %arg0, %c0_i32 : i32, i32
  }
  func.func @transform_1(%arg0: i32) -> (i32, i32) {
    %c0_i32 = arith.constant 0 : i32
    %c0_i32_0 = arith.constant 0 : i32
    %c0_i32_1 = arith.constant 0 : i32
    return %c0_i32, %c0_i32_0 : i32, i32
  }
  func.func @transform_2(%arg0: i32) -> (i32, i32) {
    %c0_i32 = arith.constant 0 : i32
    %c0_i32_0 = arith.constant 0 : i32
    %c0_i32_1 = arith.constant 0 : i32
    return %c0_i32, %c0_i32_0 : i32, i32
  }
  func.func @transform_3(%arg0: i32) -> (i32, i32) {
    %c0_i32 = arith.constant 0 : i32
    %c0_i32_0 = arith.constant 0 : i32
    return %arg0, %c0_i32 : i32, i32
  }
}

</mosaic_0001>

<llo_original>
// kernel: tpu_custom_call.1
$region0: #{tpu_custom_call.1}
  #allocation0 [shape = 'u32[]', space=smem, size = 0x4, offset = 0x4, fixed_abs, tag = 'smem constant byte address 0x4 - core index']
  #allocation1 [shape = 'u32[144,128]{1,0:T(1,128)}', space=vmem, size = 0x12000, scoped, tag = 'internal scratch']
  %s0 = inlined_call_operand.hbm [shape: f32[2,1024], index: 0, kind: input, shape index: {}]
  %s1 = inlined_call_operand.hbm [shape: f32[1024,128], index: 1, kind: input, shape index: {}]
  %s2 = inlined_call_operand.vmem [shape: f32[1,128], index: 2, kind: input, shape index: {}]
  %s3 = inlined_call_operand.hbm [shape: f32[2,128], index: 3, kind: output, shape index: {}]
  %s4 = sld [smem:[#allocation0]]
  $region30: #{tpu_custom_call.1} parent=0
    _
  %s6 = ssub.s32 1, %s4
  %s7 = scalar_select 0, %s6, %s4
  $region1: #{tpu_custom_call.1} parent=0
    #allocation2 [shape = 'u8[32768]{0}', space=vmem, size = 0x8000, scoped, tag = 'input window, operand 0, single buffered']
    #allocation3 [shape = 's32[1]{0}', space=sflag, size = 0x4, scoped, tag = 'scoped memory for tpu_custom_call.1']
    #allocation4 [shape = 's32[1]{0}', space=sflag, size = 0x4, scoped, tag = 'scoped memory for tpu_custom_call.1']
    #allocation5 [shape = 'u8[524288]{0}', space=vmem, size = 0x80000, scoped, tag = 'input window, operand 1, single buffered']
    #allocation6 [shape = 's32[1]{0}', space=sflag, size = 0x4, scoped, tag = 'scoped memory for tpu_custom_call.1']
    #allocation7 [shape = 'u8[4096]{0}', space=vmem, size = 0x1000, scoped, tag = 'output window, operand 0, single buffered']
    %8 = vsyncpa [#allocation3], 0
    %9 = vsyncpa [#allocation6], 0
    %10 = vsyncpa [#allocation4], 0
    // Predicated region
    $region2: #{tpu_custom_call.1} parent=1 // pred_check
      _
    $region3: #{tpu_custom_call.1} parent=1 // pred_check_branch
      %12 = sbr.rel (0) target = $region5
    $region4: #{tpu_custom_call.1} parent=1 // pred_region
      %s14 = ssub.s32 1024, 256
      %15 = vsyncadd [#allocation3], %s14
      %s16 = sshll.u32 [#allocation2], 4
      %s17 = int_to_ptr.vmem [resolvable:$true] %s16
      %22 = dma.hbm_to_vmem [thread:$0]  %s0, 256, %s17, [#allocation3], 256, 256, 16
    $region5: #{tpu_custom_call.1} parent=1 // pred_fallthru
      _
    // Predicated region
    $region6: #{tpu_custom_call.1} parent=1 // pred_check
      _
    $region7: #{tpu_custom_call.1} parent=1 // pred_check_branch
      %24 = sbr.rel (0) target = $region9
    $region8: #{tpu_custom_call.1} parent=1 // pred_region
      %s26 = ssub.s32 16384, 16384
      %27 = vsyncadd [#allocation6], %s26
      %s28 = sshll.u32 [#allocation5], 4
      %s29 = int_to_ptr.vmem [resolvable:$true] %s28
      %34 = dma.hbm_to_vmem [thread:$0]  %s1, 16384, %s29, [#allocation6], 128, 128, 8
    $region9: #{tpu_custom_call.1} parent=1 // pred_fallthru
      _
    // Predicated region
    $region10: #{tpu_custom_call.1} parent=1 // pred_check
      _
    $region11: #{tpu_custom_call.1} parent=1 // pred_check_branch
      %36 = sbr.rel (0) target = $region13
    $region12: #{tpu_custom_call.1} parent=1 // pred_region
      _
    $region13: #{tpu_custom_call.1} parent=1 // pred_fallthru
      _
    // Predicated region
    $region14: #{tpu_custom_call.1} parent=1 // pred_check
      _
    $region15: #{tpu_custom_call.1} parent=1 // pred_check_branch
      %38 = sbr.rel (0) target = $region17
    $region16: #{tpu_custom_call.1} parent=1 // pred_region
      %39 = dma.done [#allocation3], 1024
    $region17: #{tpu_custom_call.1} parent=1 // pred_fallthru
      _
    // Predicated region
    $region18: #{tpu_custom_call.1} parent=1 // pred_check
      _
    $region19: #{tpu_custom_call.1} parent=1 // pred_check_branch
      %41 = sbr.rel (0) target = $region21
    $region20: #{tpu_custom_call.1} parent=1 // pred_region
      %42 = dma.done [#allocation6], 16384
    $region21: #{tpu_custom_call.1} parent=1 // pred_fallthru
      _
    %v43 = vld [vmem:[#allocation2] sm:$0xff]
    %v44 = vld [vmem:[#allocation2 + $0x8] sm:$0xff]
    %v45 = vld [vmem:[#allocation2 + $0x10] sm:$0xff]
    %v46 = vld [vmem:[#allocation2 + $0x18] sm:$0xff]
    %v47 = vld [vmem:[#allocation2 + $0x20] sm:$0xff]
    %v48 = vld [vmem:[#allocation2 + $0x28] sm:$0xff]
    %v49 = vld [vmem:[#allocation2 + $0x30] sm:$0xff]
    %v50 = vld [vmem:[#allocation2 + $0x38] sm:$0xff]
    %v51 = vld [vmem:[#allocation5] sm:$0xff]
    %v52 = vld [vmem:[#allocation5 + $0x8] sm:$0xff]
    %v53 = vld [vmem:[#allocation5 + $0x10] sm:$0xff]
    %v54 = vld [vmem:[#allocation5 + $0x18] sm:$0xff]
    %v55 = vld [vmem:[#allocation5 + $0x20] sm:$0xff]
    %v56 = vld [vmem:[#allocation5 + $0x28] sm:$0xff]
    %v57 = vld [vmem:[#allocation5 + $0x30] sm:$0xff]
    %v58 = vld [vmem:[#allocation5 + $0x38] sm:$0xff]
    %v59 = vld [vmem:[#allocation5 + $0x40] sm:$0xff]
    %v60 = vld [vmem:[#allocation5 + $0x48] sm:$0xff]
    %v61 = vld [vmem:[#allocation5 + $0x50] sm:$0xff]
    %v62 = vld [vmem:[#allocation5 + $0x58] sm:$0xff]
    %v63 = vld [vmem:[#allocation5 + $0x60] sm:$0xff]
    %v64 = vld [vmem:[#allocation5 + $0x68] sm:$0xff]
    %v65 = vld [vmem:[#allocation5 + $0x70] sm:$0xff]
    %v66 = vld [vmem:[#allocation5 + $0x78] sm:$0xff]
    %v67 = vld [vmem:[#allocation5 + $0x80] sm:$0xff]
    %v68 = vld [vmem:[#allocation5 + $0x88] sm:$0xff]
    %v69 = vld [vmem:[#allocation5 + $0x90] sm:$0xff]
    %v70 = vld [vmem:[#allocation5 + $0x98] sm:$0xff]
    %v71 = vld [vmem:[#allocation5 + $0xa0] sm:$0xff]
    %v72 = vld [vmem:[#allocation5 + $0xa8] sm:$0xff]
    %v73 = vld [vmem:[#allocation5 + $0xb0] sm:$0xff]
    %v74 = vld [vmem:[#allocation5 + $0xb8] sm:$0xff]
    %v75 = vld [vmem:[#allocation5 + $0xc0] sm:$0xff]
    %v76 = vld [vmem:[#allocation5 + $0xc8] sm:$0xff]
    %v77 = vld [vmem:[#allocation5 + $0xd0] sm:$0xff]
    %v78 = vld [vmem:[#allocation5 + $0xd8] sm:$0xff]
    %v79 = vld [vmem:[#allocation5 + $0xe0] sm:$0xff]
    %v80 = vld [vmem:[#allocation5 + $0xe8] sm:$0xff]
    %v81 = vld [vmem:[#allocation5 + $0xf0] sm:$0xff]
    %v82 = vld [vmem:[#allocation5 + $0xf8] sm:$0xff]
    %v83 = vld [vmem:[#allocation5 + $0x100] sm:$0xff]
    %v84 = vld [vmem:[#allocation5 + $0x108] sm:$0xff]
    %v85 = vld [vmem:[#allocation5 + $0x110] sm:$0xff]
    %v86 = vld [vmem:[#allocation5 + $0x118] sm:$0xff]
    %v87 = vld [vmem:[#allocation5 + $0x120] sm:$0xff]
    %v88 = vld [vmem:[#allocation5 + $0x128] sm:$0xff]
    %v89 = vld [vmem:[#allocation5 + $0x130] sm:$0xff]
    %v90 = vld [vmem:[#allocation5 + $0x138] sm:$0xff]
    %v91 = vld [vmem:[#allocation5 + $0x140] sm:$0xff]
    %v92 = vld [vmem:[#allocation5 + $0x148] sm:$0xff]
    %v93 = vld [vmem:[#allocation5 + $0x150] sm:$0xff]
    %v94 = vld [vmem:[#allocation5 + $0x158] sm:$0xff]
    %v95 = vld [vmem:[#allocation5 + $0x160] sm:$0xff]
    %v96 = vld [vmem:[#allocation5 + $0x168] sm:$0xff]
    %v97 = vld [vmem:[#allocation5 + $0x170] sm:$0xff]
    %v98 = vld [vmem:[#allocation5 + $0x178] sm:$0xff]
    %v99 = vld [vmem:[#allocation5 + $0x180] sm:$0xff]
    %v100 = vld [vmem:[#allocation5 + $0x188] sm:$0xff]
    %v101 = vld [vmem:[#allocation5 + $0x190] sm:$0xff]
    %v102 = vld [vmem:[#allocation5 + $0x198] sm:$0xff]
    %v103 = vld [vmem:[#allocation5 + $0x1a0] sm:$0xff]
    %v104 = vld [vmem:[#allocation5 + $0x1a8] sm:$0xff]
    %v105 = vld [vmem:[#allocation5 + $0x1b0] sm:$0xff]
    %v106 = vld [vmem:[#allocation5 + $0x1b8] sm:$0xff]
    %v107 = vld [vmem:[#allocation5 + $0x1c0] sm:$0xff]
    %v108 = vld [vmem:[#allocation5 + $0x1c8] sm:$0xff]
    %v109 = vld [vmem:[#allocation5 + $0x1d0] sm:$0xff]
    %v110 = vld [vmem:[#allocation5 + $0x1d8] sm:$0xff]
    %v111 = vld [vmem:[#allocation5 + $0x1e0] sm:$0xff]
    %v112 = vld [vmem:[#allocation5 + $0x1e8] sm:$0xff]
    %v113 = vld [vmem:[#allocation5 + $0x1f0] sm:$0xff]
    %v114 = vld [vmem:[#allocation5 + $0x1f8] sm:$0xff]
    %v115 = vld [vmem:[#allocation5 + $0x200] sm:$0xff]
    %v116 = vld [vmem:[#allocation5 + $0x208] sm:$0xff]
    %v117 = vld [vmem:[#allocation5 + $0x210] sm:$0xff]
    %v118 = vld [vmem:[#allocation5 + $0x218] sm:$0xff]
    %v119 = vld [vmem:[#allocation5 + $0x220] sm:$0xff]
    %v120 = vld [vmem:[#allocation5 + $0x228] sm:$0xff]
    %v121 = vld [vmem:[#allocation5 + $0x230] sm:$0xff]
    %v122 = vld [vmem:[#allocation5 + $0x238] sm:$0xff]
    %v123 = vld [vmem:[#allocation5 + $0x240] sm:$0xff]
    %v124 = vld [vmem:[#allocation5 + $0x248] sm:$0xff]
    %v125 = vld [vmem:[#allocation5 + $0x250] sm:$0xff]
    %v126 = vld [vmem:[#allocation5 + $0x258] sm:$0xff]
    %v127 = vld [vmem:[#allocation5 + $0x260] sm:$0xff]
    %v128 = vld [vmem:[#allocation5 + $0x268] sm:$0xff]
    %v129 = vld [vmem:[#allocation5 + $0x270] sm:$0xff]
    %v130 = vld [vmem:[#allocation5 + $0x278] sm:$0xff]
    %v131 = vld [vmem:[#allocation5 + $0x280] sm:$0xff]
    %v132 = vld [vmem:[#allocation5 + $0x288] sm:$0xff]
    %v133 = vld [vmem:[#allocation5 + $0x290] sm:$0xff]
    %v134 = vld [vmem:[#allocation5 + $0x298] sm:$0xff]
    %v135 = vld [vmem:[#allocation5 + $0x2a0] sm:$0xff]
    %v136 = vld [vmem:[#allocation5 + $0x2a8] sm:$0xff]
    %v137 = vld [vmem:[#allocation5 + $0x2b0] sm:$0xff]
    %v138 = vld [vmem:[#allocation5 + $0x2b8] sm:$0xff]
    %v139 = vld [vmem:[#allocation5 + $0x2c0] sm:$0xff]
    %v140 = vld [vmem:[#allocation5 + $0x2c8] sm:$0xff]
    %v141 = vld [vmem:[#allocation5 + $0x2d0] sm:$0xff]
    %v142 = vld [vmem:[#allocation5 + $0x2d8] sm:$0xff]
    %v143 = vld [vmem:[#allocation5 + $0x2e0] sm:$0xff]
    %v144 = vld [vmem:[#allocation5 + $0x2e8] sm:$0xff]
    %v145 = vld [vmem:[#allocation5 + $0x2f0] sm:$0xff]
    %v146 = vld [vmem:[#allocation5 + $0x2f8] sm:$0xff]
    %v147 = vld [vmem:[#allocation5 + $0x300] sm:$0xff]
    %v148 = vld [vmem:[#allocation5 + $0x308] sm:$0xff]
    %v149 = vld [vmem:[#allocation5 + $0x310] sm:$0xff]
    %v150 = vld [vmem:[#allocation5 + $0x318] sm:$0xff]
    %v151 = vld [vmem:[#allocation5 + $0x320] sm:$0xff]
    %v152 = vld [vmem:[#allocation5 + $0x328] sm:$0xff]
    %v153 = vld [vmem:[#allocation5 + $0x330] sm:$0xff]
    %v154 = vld [vmem:[#allocation5 + $0x338] sm:$0xff]
    %v155 = vld [vmem:[#allocation5 + $0x340] sm:$0xff]
    %v156 = vld [vmem:[#allocation5 + $0x348] sm:$0xff]
    %v157 = vld [vmem:[#allocation5 + $0x350] sm:$0xff]
    %v158 = vld [vmem:[#allocation5 + $0x358] sm:$0xff]
    %v159 = vld [vmem:[#allocation5 + $0x360] sm:$0xff]
    %v160 = vld [vmem:[#allocation5 + $0x368] sm:$0xff]
    %v161 = vld [vmem:[#allocation5 + $0x370] sm:$0xff]
    %v162 = vld [vmem:[#allocation5 + $0x378] sm:$0xff]
    %v163 = vld [vmem:[#allocation5 + $0x380] sm:$0xff]
    %v164 = vld [vmem:[#allocation5 + $0x388] sm:$0xff]
    %v165 = vld [vmem:[#allocation5 + $0x390] sm:$0xff]
    %v166 = vld [vmem:[#allocation5 + $0x398] sm:$0xff]
    %v167 = vld [vmem:[#allocation5 + $0x3a0] sm:$0xff]
    %v168 = vld [vmem:[#allocation5 + $0x3a8] sm:$0xff]
    %v169 = vld [vmem:[#allocation5 + $0x3b0] sm:$0xff]
    %v170 = vld [vmem:[#allocation5 + $0x3b8] sm:$0xff]
    %v171 = vld [vmem:[#allocation5 + $0x3c0] sm:$0xff]
    %v172 = vld [vmem:[#allocation5 + $0x3c8] sm:$0xff]
    %v173 = vld [vmem:[#allocation5 + $0x3d0] sm:$0xff]
    %v174 = vld [vmem:[#allocation5 + $0x3d8] sm:$0xff]
    %v175 = vld [vmem:[#allocation5 + $0x3e0] sm:$0xff]
    %v176 = vld [vmem:[#allocation5 + $0x3e8] sm:$0xff]
    %v177 = vld [vmem:[#allocation5 + $0x3f0] sm:$0xff]
    %v178 = vld [vmem:[#allocation5 + $0x3f8] sm:$0xff]
    %v179 = vld [vmem:[%s2] sm:$0x1]
    %v181 = vlaneseq
    %v182 = vshrl.u32 %v181, 7
    %v183 = vsub.s32 0, %v182
    %v184 = vrot.slane %v179, %v183
    %v194 = vcombine.low %v43, %v45
    %v195 = vcombine.high %v43, %v45
    %v196 = vcombine.low %v47, %v49
    %v197 = vcombine.high %v47, %v49
    %v199 = vunpack.c.l.s4 1983009808
    %v200 = vunpack.c.0.s8 %v199
    %v201 = vlaneseq
    %v202 = vshrl.u32 %v201, 7
    %v203 = vsub.s32 %v200, %v202
    %v204 = vrot.slane %v194, %v203
    %v206 = vunpack.c.l.s4 1983009808
    %v207 = vunpack.c.0.s8 %v206
    %v208 = vlaneseq
    %v209 = vshrl.u32 %v208, 7
    %v210 = vsub.s32 %v207, %v209
    %v211 = vrot.slane %v195, %v210
    %v213 = vunpack.c.l.s4 1983009808
    %v214 = vunpack.c.0.s8 %v213
    %v215 = vlaneseq
    %v216 = vshrl.u32 %v215, 7
    %v217 = vsub.s32 %v214, %v216
    %v218 = vrot.slane %v196, %v217
    %v220 = vunpack.c.l.s4 1983009808
    %v221 = vunpack.c.0.s8 %v220
    %v222 = vlaneseq
    %v223 = vshrl.u32 %v222, 7
    %v224 = vsub.s32 %v221, %v223
    %v225 = vrot.slane %v197, %v224
    %v226 = vcombine.low %v204, %v218
    %v227 = vcombine.high %v204, %v218
    %v228 = vcombine.low %v211, %v225
    %v229 = vcombine.high %v211, %v225
    %v230 = vcombine.low %v44, %v46
    %v231 = vcombine.high %v44, %v46
    %v232 = vcombine.low %v48, %v50
    %v233 = vcombine.high %v48, %v50
    %v235 = vunpack.c.l.s4 1983009808
    %v236 = vunpack.c.0.s8 %v235
    %v237 = vlaneseq
    %v238 = vshrl.u32 %v237, 7
    %v239 = vsub.s32 %v236, %v238
    %v240 = vrot.slane %v230, %v239
    %v242 = vunpack.c.l.s4 1983009808
    %v243 = vunpack.c.0.s8 %v242
    %v244 = vlaneseq
    %v245 = vshrl.u32 %v244, 7
    %v246 = vsub.s32 %v243, %v245
    %v247 = vrot.slane %v231, %v246
    %v249 = vunpack.c.l.s4 1983009808
    %v250 = vunpack.c.0.s8 %v249
    %v251 = vlaneseq
    %v252 = vshrl.u32 %v251, 7
    %v253 = vsub.s32 %v250, %v252
    %v254 = vrot.slane %v232, %v253
    %v256 = vunpack.c.l.s4 1983009808
    %v257 = vunpack.c.0.s8 %v256
    %v258 = vlaneseq
    %v259 = vshrl.u32 %v258, 7
    %v260 = vsub.s32 %v257, %v259
    %v261 = vrot.slane %v233, %v260
    %v262 = vcombine.low %v240, %v254
    %v263 = vcombine.high %v240, %v254
    %v264 = vcombine.low %v247, %v261
    %v265 = vcombine.high %v247, %v261
    %274 = vmatprep.subr.mxu0 0.0
    %275 = vmatpush1.msra.mxu0 %v51
    %276 = vmatprep.subr.mxu0 0.0
    %277 = vmatpush1.msra.mxu0 %v52
    %278 = vmatprep.subr.mxu0 0.0
    %279 = vmatpush1.msra.mxu0 %v53
    %280 = vmatprep.subr.mxu0 0.0
    %281 = vmatpush1.msra.mxu0 %v54
    %282 = vmatprep.subr.mxu0 0.0
    %283 = vmatpush1.msra.mxu0 %v55
    %284 = vmatprep.subr.mxu0 0.0
    %285 = vmatpush1.msra.mxu0 %v56
    %286 = vmatprep.subr.mxu0 0.0
    %287 = vmatpush1.msra.mxu0 %v57
    %288 = vmatprep.subr.mxu0 0.0
    %289 = vmatpush1.msra.mxu0 %v58
    %290 = vmatprep.subr.mxu0 0.0
    %291 = vmatpush1.msra.mxu0 %v59
    %292 = vmatprep.subr.mxu0 0.0
    %293 = vmatpush1.msra.mxu0 %v60
    %294 = vmatprep.subr.mxu0 0.0
    %295 = vmatpush1.msra.mxu0 %v61
    %296 = vmatprep.subr.mxu0 0.0
    %297 = vmatpush1.msra.mxu0 %v62
    %298 = vmatprep.subr.mxu0 0.0
    %299 = vmatpush1.msra.mxu0 %v63
    %300 = vmatprep.subr.mxu0 0.0
    %301 = vmatpush1.msra.mxu0 %v64
    %302 = vmatprep.subr.mxu0 0.0
    %303 = vmatpush1.msra.mxu0 %v65
    %304 = vmatprep.subr.mxu0 0.0
    %305 = vmatpush1.msra.mxu0 %v66
    %306 = vmatprep.subr.mxu0 0.0
    %307 = vmatpush1.msra.mxu0 %v67
    %308 = vmatprep.subr.mxu0 0.0
    %309 = vmatpush1.msra.mxu0 %v68
    %310 = vmatprep.subr.mxu0 0.0
    %311 = vmatpush1.msra.mxu0 %v69
    %312 = vmatprep.subr.mxu0 0.0
    %313 = vmatpush1.msra.mxu0 %v70
    %314 = vmatprep.subr.mxu0 0.0
    %315 = vmatpush1.msra.mxu0 %v71
    %316 = vmatprep.subr.mxu0 0.0
    %317 = vmatpush1.msra.mxu0 %v72
    %318 = vmatprep.subr.mxu0 0.0
    %319 = vmatpush1.msra.mxu0 %v73
    %320 = vmatprep.subr.mxu0 0.0
    %321 = vmatpush1.msra.mxu0 %v74
    %322 = vmatprep.subr.mxu0 0.0
    %323 = vmatpush1.msra.mxu0 %v75
    %324 = vmatprep.subr.mxu0 0.0
    %325 = vmatpush1.msra.mxu0 %v76
    %326 = vmatprep.subr.mxu0 0.0
    %327 = vmatpush1.msra.mxu0 %v77
    %328 = vmatprep.subr.mxu0 0.0
    %329 = vmatpush1.msra.mxu0 %v78
    %330 = vmatprep.subr.mxu0 0.0
    %331 = vmatpush1.msra.mxu0 %v79
    %332 = vmatprep.subr.mxu0 0.0
    %333 = vmatpush1.msra.mxu0 %v80
    %334 = vmatprep.subr.mxu0 0.0
    %335 = vmatpush1.msra.mxu0 %v81
    %336 = vmatprep.subr.mxu0 0.0
    %337 = vmatpush1.msra.mxu0 %v82
    %338 = vmatprep.mubr.f32.mxu0 %v227
    %339 = vmatmul.mubr.f32.gmra.mrb[0].mxu0 %v226
    %v340 = vpop.f32.mrb[0].mxu0
    %v341 = vadd.f32 %v184, %v340
    %v342 = vpop.f32.mrb[0].mxu0
    %343 = vdwg.mxu0
    %344 = vmatprep.subr.mxu0 0.0
    %345 = vmatpush1.msra.mxu0 %v83
    %346 = vmatprep.subr.mxu0 0.0
    %347 = vmatpush1.msra.mxu0 %v84
    %348 = vmatprep.subr.mxu0 0.0
    %349 = vmatpush1.msra.mxu0 %v85
    %350 = vmatprep.subr.mxu0 0.0
    %351 = vmatpush1.msra.mxu0 %v86
    %352 = vmatprep.subr.mxu0 0.0
    %353 = vmatpush1.msra.mxu0 %v87
    %354 = vmatprep.subr.mxu0 0.0
    %355 = vmatpush1.msra.mxu0 %v88
    %356 = vmatprep.subr.mxu0 0.0
    %357 = vmatpush1.msra.mxu0 %v89
    %358 = vmatprep.subr.mxu0 0.0
    %359 = vmatpush1.msra.mxu0 %v90
    %360 = vmatprep.subr.mxu0 0.0
    %361 = vmatpush1.msra.mxu0 %v91
    %362 = vmatprep.subr.mxu0 0.0
    %363 = vmatpush1.msra.mxu0 %v92
    %364 = vmatprep.subr.mxu0 0.0
    %365 = vmatpush1.msra.mxu0 %v93
    %366 = vmatprep.subr.mxu0 0.0
    %367 = vmatpush1.msra.mxu0 %v94
    %368 = vmatprep.subr.mxu0 0.0
    %369 = vmatpush1.msra.mxu0 %v95
    %370 = vmatprep.subr.mxu0 0.0
    %371 = vmatpush1.msra.mxu0 %v96
    %372 = vmatprep.subr.mxu0 0.0
    %373 = vmatpush1.msra.mxu0 %v97
    %374 = vmatprep.subr.mxu0 0.0
    %375 = vmatpush1.msra.mxu0 %v98
    %376 = vmatprep.subr.mxu0 0.0
    %377 = vmatpush1.msra.mxu0 %v99
    %378 = vmatprep.subr.mxu0 0.0
    %379 = vmatpush1.msra.mxu0 %v100
    %380 = vmatprep.subr.mxu0 0.0
    %381 = vmatpush1.msra.mxu0 %v101
    %382 = vmatprep.subr.mxu0 0.0
    %383 = vmatpush1.msra.mxu0 %v102
    %384 = vmatprep.subr.mxu0 0.0
    %385 = vmatpush1.msra.mxu0 %v103
    %386 = vmatprep.subr.mxu0 0.0
    %387 = vmatpush1.msra.mxu0 %v104
    %388 = vmatprep.subr.mxu0 0.0
    %389 = vmatpush1.msra.mxu0 %v105
    %390 = vmatprep.subr.mxu0 0.0
    %391 = vmatpush1.msra.mxu0 %v106
    %392 = vmatprep.subr.mxu0 0.0
    %393 = vmatpush1.msra.mxu0 %v107
    %394 = vmatprep.subr.mxu0 0.0
    %395 = vmatpush1.msra.mxu0 %v108
    %396 = vmatprep.subr.mxu0 0.0
    %397 = vmatpush1.msra.mxu0 %v109
    %398 = vmatprep.subr.mxu0 0.0
    %399 = vmatpush1.msra.mxu0 %v110
    %400 = vmatprep.subr.mxu0 0.0
    %401 = vmatpush1.msra.mxu0 %v111
    %402 = vmatprep.subr.mxu0 0.0
    %403 = vmatpush1.msra.mxu0 %v112
    %404 = vmatprep.subr.mxu0 0.0
    %405 = vmatpush1.msra.mxu0 %v113
    %406 = vmatprep.subr.mxu0 0.0
    %407 = vmatpush1.msra.mxu0 %v114
    %408 = vmatprep.mubr.f32.mxu0 %v229
    %409 = vmatmul.mubr.f32.gmra.mrb[0].mxu0 %v228
    %v410 = vpop.f32.mrb[0].mxu0
    %v411 = vadd.f32 %v341, %v410
    %v412 = vpop.f32.mrb[0].mxu0
    %413 = vdwg.mxu0
    %414 = vmatprep.subr.mxu0 0.0
    %415 = vmatpush1.msra.mxu0 %v115
    %416 = vmatprep.subr.mxu0 0.0
    %417 = vmatpush1.msra.mxu0 %v116
    %418 = vmatprep.subr.mxu0 0.0
    %419 = vmatpush1.msra.mxu0 %v117
    %420 = vmatprep.subr.mxu0 0.0
    %421 = vmatpush1.msra.mxu0 %v118
    %422 = vmatprep.subr.mxu0 0.0
    %423 = vmatpush1.msra.mxu0 %v119
    %424 = vmatprep.subr.mxu0 0.0
    %425 = vmatpush1.msra.mxu0 %v120
    %426 = vmatprep.subr.mxu0 0.0
    %427 = vmatpush1.msra.mxu0 %v121
    %428 = vmatprep.subr.mxu0 0.0
    %429 = vmatpush1.msra.mxu0 %v122
    %430 = vmatprep.subr.mxu0 0.0
    %431 = vmatpush1.msra.mxu0 %v123
    %432 = vmatprep.subr.mxu0 0.0
    %433 = vmatpush1.msra.mxu0 %v124
    %434 = vmatprep.subr.mxu0 0.0
    %435 = vmatpush1.msra.mxu0 %v125
    %436 = vmatprep.subr.mxu0 0.0
    %437 = vmatpush1.msra.mxu0 %v126
    %438 = vmatprep.subr.mxu0 0.0
    %439 = vmatpush1.msra.mxu0 %v127
    %440 = vmatprep.subr.mxu0 0.0
    %441 = vmatpush1.msra.mxu0 %v128
    %442 = vmatprep.subr.mxu0 0.0
    %443 = vmatpush1.msra.mxu0 %v129
    %444 = vmatprep.subr.mxu0 0.0
    %445 = vmatpush1.msra.mxu0 %v130
    %446 = vmatprep.subr.mxu0 0.0
    %447 = vmatpush1.msra.mxu0 %v131
    %448 = vmatprep.subr.mxu0 0.0
    %449 = vmatpush1.msra.mxu0 %v132
    %450 = vmatprep.subr.mxu0 0.0
    %451 = vmatpush1.msra.mxu0 %v133
    %452 = vmatprep.subr.mxu0 0.0
    %453 = vmatpush1.msra.mxu0 %v134
    %454 = vmatprep.subr.mxu0 0.0
    %455 = vmatpush1.msra.mxu0 %v135
    %456 = vmatprep.subr.mxu0 0.0
    %457 = vmatpush1.msra.mxu0 %v136
    %458 = vmatprep.subr.mxu0 0.0
    %459 = vmatpush1.msra.mxu0 %v137
    %460 = vmatprep.subr.mxu0 0.0
    %461 = vmatpush1.msra.mxu0 %v138
    %462 = vmatprep.subr.mxu0 0.0
    %463 = vmatpush1.msra.mxu0 %v139
    %464 = vmatprep.subr.mxu0 0.0
    %465 = vmatpush1.msra.mxu0 %v140
    %466 = vmatprep.subr.mxu0 0.0
    %467 = vmatpush1.msra.mxu0 %v141
    %468 = vmatprep.subr.mxu0 0.0
    %469 = vmatpush1.msra.mxu0 %v142
    %470 = vmatprep.subr.mxu0 0.0
    %471 = vmatpush1.msra.mxu0 %v143
    %472 = vmatprep.subr.mxu0 0.0
    %473 = vmatpush1.msra.mxu0 %v144
    %474 = vmatprep.subr.mxu0 0.0
    %475 = vmatpush1.msra.mxu0 %v145
    %476 = vmatprep.subr.mxu0 0.0
    %477 = vmatpush1.msra.mxu0 %v146
    %478 = vmatprep.mubr.f32.mxu0 %v263
    %479 = vmatmul.mubr.f32.gmra.mrb[0].mxu0 %v262
    %v480 = vpop.f32.mrb[0].mxu0
    %v481 = vadd.f32 %v411, %v480
    %v482 = vpop.f32.mrb[0].mxu0
    %483 = vdwg.mxu0
    %484 = vmatprep.subr.mxu0 0.0
    %485 = vmatpush1.msra.mxu0 %v147
    %486 = vmatprep.subr.mxu0 0.0
    %487 = vmatpush1.msra.mxu0 %v148
    %488 = vmatprep.subr.mxu0 0.0
    %489 = vmatpush1.msra.mxu0 %v149
    %490 = vmatprep.subr.mxu0 0.0
    %491 = vmatpush1.msra.mxu0 %v150
    %492 = vmatprep.subr.mxu0 0.0
    %493 = vmatpush1.msra.mxu0 %v151
    %494 = vmatprep.subr.mxu0 0.0
    %495 = vmatpush1.msra.mxu0 %v152
    %496 = vmatprep.subr.mxu0 0.0
    %497 = vmatpush1.msra.mxu0 %v153
    %498 = vmatprep.subr.mxu0 0.0
    %499 = vmatpush1.msra.mxu0 %v154
    %500 = vmatprep.subr.mxu0 0.0
    %501 = vmatpush1.msra.mxu0 %v155
    %502 = vmatprep.subr.mxu0 0.0
    %503 = vmatpush1.msra.mxu0 %v156
    %504 = vmatprep.subr.mxu0 0.0
    %505 = vmatpush1.msra.mxu0 %v157
    %506 = vmatprep.subr.mxu0 0.0
    %507 = vmatpush1.msra.mxu0 %v158
    %508 = vmatprep.subr.mxu0 0.0
    %509 = vmatpush1.msra.mxu0 %v159
    %510 = vmatprep.subr.mxu0 0.0
    %511 = vmatpush1.msra.mxu0 %v160
    %512 = vmatprep.subr.mxu0 0.0
    %513 = vmatpush1.msra.mxu0 %v161
    %514 = vmatprep.subr.mxu0 0.0
    %515 = vmatpush1.msra.mxu0 %v162
    %516 = vmatprep.subr.mxu0 0.0
    %517 = vmatpush1.msra.mxu0 %v163
    %518 = vmatprep.subr.mxu0 0.0
    %519 = vmatpush1.msra.mxu0 %v164
    %520 = vmatprep.subr.mxu0 0.0
    %521 = vmatpush1.msra.mxu0 %v165
    %522 = vmatprep.subr.mxu0 0.0
    %523 = vmatpush1.msra.mxu0 %v166
    %524 = vmatprep.subr.mxu0 0.0
    %525 = vmatpush1.msra.mxu0 %v167
    %526 = vmatprep.subr.mxu0 0.0
    %527 = vmatpush1.msra.mxu0 %v168
    %528 = vmatprep.subr.mxu0 0.0
    %529 = vmatpush1.msra.mxu0 %v169
    %530 = vmatprep.subr.mxu0 0.0
    %531 = vmatpush1.msra.mxu0 %v170
    %532 = vmatprep.subr.mxu0 0.0
    %533 = vmatpush1.msra.mxu0 %v171
    %534 = vmatprep.subr.mxu0 0.0
    %535 = vmatpush1.msra.mxu0 %v172
    %536 = vmatprep.subr.mxu0 0.0
    %537 = vmatpush1.msra.mxu0 %v173
    %538 = vmatprep.subr.mxu0 0.0
    %539 = vmatpush1.msra.mxu0 %v174
    %540 = vmatprep.subr.mxu0 0.0
    %541 = vmatpush1.msra.mxu0 %v175
    %542 = vmatprep.subr.mxu0 0.0
    %543 = vmatpush1.msra.mxu0 %v176
    %544 = vmatprep.subr.mxu0 0.0
    %545 = vmatpush1.msra.mxu0 %v177
    %546 = vmatprep.subr.mxu0 0.0
    %547 = vmatpush1.msra.mxu0 %v178
    %548 = vmatprep.mubr.f32.mxu0 %v265
    %549 = vmatmul.mubr.f32.gmra.mrb[0].mxu0 %v264
    %v550 = vpop.f32.mrb[0].mxu0
    %v551 = vadd.f32 %v481, %v550
    %v552 = vpop.f32.mrb[0].mxu0
    %553 = vdwg.mxu0
    %554 = vst [vmem:[#allocation7] sm:$0xff] %v551
    // Predicated region
    $region22: #{tpu_custom_call.1} parent=1 // pred_check
      _
    $region23: #{tpu_custom_call.1} parent=1 // pred_check_branch
      %556 = sbr.rel (0) target = $region25
    $region24: #{tpu_custom_call.1} parent=1 // pred_region
      %s558 = ssub.s32 128, 32
      %559 = vsyncadd [#allocation4], %s558
      %s560 = sshll.u32 [#allocation7], 4
      %s561 = int_to_ptr.vmem [resolvable:$true] %s560
      %566 = dma.vmem_to_hbm [thread:$0]  %s561, 32, %s3, [#allocation4], 32, 32, 2
    $region25: #{tpu_custom_call.1} parent=1 // pred_fallthru
      _
    // Predicated region
    $region26: #{tpu_custom_call.1} parent=1 // pred_check
      _
    $region27: #{tpu_custom_call.1} parent=1 // pred_check_branch
      %568 = sbr.rel (0) target = $region29
    $region28: #{tpu_custom_call.1} parent=1 // pred_region
      %569 = dma.done [#allocation4], 128
    $region29: #{tpu_custom_call.1} parent=1 // pred_fallthru
      _
    %570 = vsyncpa [#allocation3], 1
    %571 = vsyncpa [#allocation6], 1
    %572 = vsyncpa [#allocation4], 1

</llo_original>
